<compile_context>
chip_gen: v6e
topology: v6e:2x2x1
jax: 0.10.0
libtpu: 0.0.40
codegen_flags: <defaults>
</compile_context>

<pallas_src>
import functools
import math

import jax
import jax.numpy as jnp
from jax.experimental import pallas as pl
from jax.experimental.pallas import tpu as pltpu


def _logsoftmax_kernel(x_ref, o_ref, *, reverse: bool):
    # x_ref block: (TB, S, TH); reduce over axis -2 (the S axis).
    # Upcast to f32 in-kernel for a numerically safe log-sum-exp even when
    # the I/O dtype is bf16 (halves HBM traffic on a bandwidth-bound kernel).
    x = x_ref[...].astype(jnp.float32)
    m = jnp.max(x, axis=-2, keepdims=True)
    shifted = x - m
    lse = jnp.log(jnp.sum(jnp.exp(shifted), axis=-2, keepdims=True))
    out = shifted - lse
    if reverse:
        out = -out
    o_ref[...] = out.astype(o_ref.dtype)


def _choose_tiles(B: int, S: int, H: int, itemsize: int,
                  target_bytes: int = 1 << 20):
    """Pick (TB, TH) so each block is ~target_bytes and lane-dense."""
    # Lane tile: must be a multiple of 128 or equal to the full H extent.
    if H % 128 == 0:
        max_th = max(128, (target_bytes // max(S * itemsize, 1)) // 128 * 128)
        TH = min(H, max_th)
        # Prefer a TH that divides H exactly (full, unmasked blocks).
        th = TH
        while th >= 128 and H % th != 0:
            th -= 128
        if th >= 128:
            TH = th
    else:
        # Sub-128 / ragged H: present the full trailing dim (Mosaic pads;
        # still correct, just masked stores).
        TH = H

    block_h_bytes = S * TH * itemsize
    # Batch tile: fold rows together to amortize the ~0.35 us per-step
    # pipeline overhead when S*TH is small.
    TB = max(1, min(B, target_bytes // max(block_h_bytes, 1)))
    return TB, TH


def embedder_forward(x: jax.Array, *, reverse: bool = False) -> jax.Array:
    """LogSoftmax over dim=-2 via a tiled Pallas TPU kernel."""
    assert x.ndim >= 2, "expected at least 2 dims (..., S, H)"
    orig_shape = x.shape
    S, H = x.shape[-2], x.shape[-1]
    B = math.prod(x.shape[:-2]) if x.ndim > 2 else 1
    x3 = x.reshape(B, S, H)

    TB, TH = _choose_tiles(B, S, H, x.dtype.itemsize)
    grid = (pl.cdiv(B, TB), pl.cdiv(H, TH))

    kernel = functools.partial(_logsoftmax_kernel, reverse=reverse)

    # Advisory cost: purely HBM-bandwidth-bound (read + write every element);
    # exp per element + a log per (b, h) column on the EUP (never saturates).
    n_elem = B * S * H
    cost = pl.CostEstimate(
        flops=4 * n_elem,
        transcendentals=n_elem + B * H,
        bytes_accessed=2 * n_elem * x.dtype.itemsize,
    )

    out = pl.pallas_call(
        kernel,
        out_shape=jax.ShapeDtypeStruct((B, S, H), x.dtype),
        grid_spec=pltpu.PrefetchScalarGridSpec(
            num_scalar_prefetch=0,
            grid=grid,
            in_specs=[pl.BlockSpec((TB, S, TH), lambda b, h: (b, 0, h))],
            out_specs=pl.BlockSpec((TB, S, TH), lambda b, h: (b, 0, h)),
        ),
        compiler_params=pltpu.CompilerParams(
            # S is fully resident per block, so there is no reduction grid
            # axis: both axes are independent -> 'parallel' (v7x 2-TC shard).
            dimension_semantics=("parallel", "parallel"),
            # Explicit headroom: safe on v5e (16 MiB default scoped) through
            # v7x (64 MiB physical); blocks are sized ~1 MiB so
            # double-buffered in+out plus f32 temps stays well under this.
            vmem_limit_bytes=32 * 1024 * 1024,
        ),
        cost_estimate=cost,
    )(x3)
    return out.reshape(orig_shape)


if __name__ == "__main__":
    key = jax.random.PRNGKey(0)
    B, S, H = 2, 8, 128  # batch=2, seq=8, hidden=128
    x = jax.random.normal(key, (B, S, H), dtype=jnp.float32)

    # forward (reverse=False) and reverse=True variants
    out = jax.block_until_ready(embedder_forward(x, reverse=False))
    out_rev = jax.block_until_ready(embedder_forward(x, reverse=True))

    # correctness check vs. plain JAX reference
    ref = jax.nn.log_softmax(x, axis=-2)
    assert jnp.allclose(out, ref, atol=1e-5, rtol=1e-5)
    assert jnp.allclose(out_rev, -ref, atol=1e-5, rtol=1e-5)
    assert out.shape == x.shape and out.dtype == x.dtype

    # also exercise the tiling path (multi-block grid over batch and hidden)
    x_big = jax.random.normal(key, (8, 64, 512), dtype=jnp.bfloat16)
    out_big = jax.block_until_ready(embedder_forward(x_big, reverse=False))
    ref_big = jax.nn.log_softmax(x_big.astype(jnp.float32), axis=-2)
    assert jnp.allclose(out_big.astype(jnp.float32), ref_big, atol=2e-2, rtol=2e-2)
    assert out_big.shape == x_big.shape and out_big.dtype == x_big.dtype

    print("KERNEL_OK")
</pallas_src>

<mosaic_0001>
module attributes {stable_mosaic.version = 11 : i64} {
  func.func @_logsoftmax_kernel(%arg0: i32, %arg1: i32, %arg2: memref<2x8x128xf32, #tpu.memory_space<vmem>>, %arg3: memref<2x8x128xf32, #tpu.memory_space<vmem>>) attributes {dimension_semantics = [#tpu.dimension_semantics<parallel>, #tpu.dimension_semantics<parallel>], iteration_bounds = array<i64: 1, 1>, scalar_prefetch = 0 : i64, scratch_operands = 0 : i64, tpu.core_type = #tpu.core_type<tc>, window_params = [{transform_indices = @transform_0, window_bounds = array<i64: 2, 8, 128>}, {transform_indices = @transform_1, window_bounds = array<i64: 2, 8, 128>}]} {
    %c0 = arith.constant 0 : index
    %c0_0 = arith.constant 0 : index
    %c0_1 = arith.constant 0 : index
    %0 = vector.load %arg2[%c0, %c0_0, %c0_1] : memref<2x8x128xf32, #tpu.memory_space<vmem>>, vector<2x8x128xf32>
    %cst = arith.constant dense<0xFF800000> : vector<2x128xf32>
    %1 = vector.multi_reduction <maximumf>, %0, %cst [1] : vector<2x8x128xf32> to vector<2x128xf32>
    %2 = vector.shape_cast %1 : vector<2x128xf32> to vector<2x1x128xf32>
    %3 = vector.broadcast %2 : vector<2x1x128xf32> to vector<2x8x128xf32>
    %4 = arith.subf %0, %3 : vector<2x8x128xf32>
    %5 = math.exp %4 : vector<2x8x128xf32>
    %cst_2 = arith.constant dense<0.000000e+00> : vector<2x128xf32>
    %6 = vector.multi_reduction <add>, %5, %cst_2 [1] : vector<2x8x128xf32> to vector<2x128xf32>
    %7 = vector.shape_cast %6 : vector<2x128xf32> to vector<2x1x128xf32>
    %8 = math.log %7 : vector<2x1x128xf32>
    %9 = vector.broadcast %8 : vector<2x1x128xf32> to vector<2x8x128xf32>
    %10 = arith.subf %4, %9 : vector<2x8x128xf32>
    %c0_3 = arith.constant 0 : index
    %c0_4 = arith.constant 0 : index
    %c0_5 = arith.constant 0 : index
    %11 = vector.load %arg3[%c0_3, %c0_4, %c0_5] : memref<2x8x128xf32, #tpu.memory_space<vmem>>, vector<2x8x128xf32>
    tpu.vector_store %arg3[%c0_3, %c0_4, %c0_5], %10 {strides = array<i32>} : memref<2x8x128xf32, #tpu.memory_space<vmem>>, vector<2x8x128xf32>,
    return
  }
  func.func @transform_0(%arg0: i32, %arg1: i32) -> (i32, i32, i32) {
    %c0_i32 = arith.constant 0 : i32
    %c0_i32_0 = arith.constant 0 : i32
    return %arg0, %c0_i32, %arg1 : i32, i32, i32
  }
  func.func @transform_1(%arg0: i32, %arg1: i32) -> (i32, i32, i32) {
    %c0_i32 = arith.constant 0 : i32
    %c0_i32_0 = arith.constant 0 : i32
    return %arg0, %c0_i32, %arg1 : i32, i32, i32
  }
}

</mosaic_0001>

<llo_original>
// kernel: tpu_custom_call.1
$region0: #{tpu_custom_call.1}
  #allocation0 [shape = 'u32[]', space=smem, size = 0x4, offset = 0x4, fixed_abs, tag = 'smem constant byte address 0x4 - core index']
  #allocation1 [shape = 'u32[144,128]{1,0:T(1,128)}', space=vmem, size = 0x12000, scoped, tag = 'internal scratch']
  %s0 = inlined_call_operand.hbm [shape: f32[2,8,128], index: 0, kind: input, shape index: {}]
  %s1 = inlined_call_operand.hbm [shape: f32[2,8,128], index: 1, kind: output, shape index: {}]
  %s2 = sld [smem:[#allocation0]]
  $region18: #{tpu_custom_call.1} parent=0
    _
  %s4 = ssub.s32 1, %s2
  %s5 = scalar_select 0, %s4, %s2
  $region1: #{tpu_custom_call.1} parent=0
    #allocation2 [shape = 'u8[8192]{0}', space=vmem, size = 0x2000, scoped, tag = 'input window, operand 0, single buffered']
    #allocation3 [shape = 's32[1]{0}', space=sflag, size = 0x4, scoped, tag = 'scoped memory for tpu_custom_call.1']
    #allocation4 [shape = 's32[1]{0}', space=sflag, size = 0x4, scoped, tag = 'scoped memory for tpu_custom_call.1']
    #allocation5 [shape = 'u8[8192]{0}', space=vmem, size = 0x2000, scoped, tag = 'output window, operand 0, single buffered']
    %6 = vsyncpa [#allocation3], 0
    %7 = vsyncpa [#allocation4], 0
    // Predicated region
    $region2: #{tpu_custom_call.1} parent=1 // pred_check
      _
    $region3: #{tpu_custom_call.1} parent=1 // pred_check_branch
      %9 = sbr.rel (0) target = $region5
    $region4: #{tpu_custom_call.1} parent=1 // pred_region
      %s11 = ssub.s32 256, 256
      %12 = vsyncadd [#allocation3], %s11
      %s13 = sshll.u32 [#allocation2], 4
      %s14 = int_to_ptr.vmem [resolvable:$true] %s13
      %19 = dma.hbm_to_vmem [thread:$0]  %s0, 256, %s14, [#allocation3], 128, 128, 8
    $region5: #{tpu_custom_call.1} parent=1 // pred_fallthru
      _
    // Predicated region
    $region6: #{tpu_custom_call.1} parent=1 // pred_check
      _
    $region7: #{tpu_custom_call.1} parent=1 // pred_check_branch
      %21 = sbr.rel (0) target = $region9
    $region8: #{tpu_custom_call.1} parent=1 // pred_region
      %22 = dma.done [#allocation3], 256
    $region9: #{tpu_custom_call.1} parent=1 // pred_fallthru
      _
    %v23 = vld [vmem:[#allocation2] sm:$0xff]
    %v24 = vld [vmem:[#allocation2 + $0x8] sm:$0xff]
    %v25 = vrot.slane %v23, 4
    %v26 = vmax.f32 %v23, %v25
    %v27 = vrot.slane %v26, 2
    %v28 = vmax.f32 %v26, %v27
    %v29 = vrot.slane %v28, 1
    %v30 = vmax.f32 %v28, %v29
    %v31 = vrot.slane %v24, 4
    %v32 = vmax.f32 %v24, %v31
    %v33 = vrot.slane %v32, 2
    %v34 = vmax.f32 %v32, %v33
    %v35 = vrot.slane %v34, 1
    %v36 = vmax.f32 %v34, %v35
    %v37 = vsub.f32 %v23, %v30
    %v38 = vsub.f32 %v24, %v36
    %v39 = vmul.f32 %v37, 1.442695
    %v40 = vpow.pop %v39
    %v41 = vmul.f32 %v38, 1.442695
    %v42 = vpow.pop %v41
    %v43 = vrot.slane %v40, 4
    %v44 = vadd.f32 %v40, %v43
    %v45 = vrot.slane %v44, 2
    %v46 = vadd.f32 %v44, %v45
    %v47 = vrot.slane %v46, 1
    %v48 = vadd.f32 %v46, %v47
    %v49 = vrot.slane %v42, 4
    %v50 = vadd.f32 %v42, %v49
    %v51 = vrot.slane %v50, 2
    %v52 = vadd.f32 %v50, %v51
    %v53 = vrot.slane %v52, 1
    %v54 = vadd.f32 %v52, %v53
    %v55 = vlog2.pop %v48
    %v56 = vmul.f32 %v55, 0.6931472
    %v57 = vlog2.pop %v54
    %v58 = vmul.f32 %v57, 0.6931472
    %v59 = vsub.f32 %v37, %v56
    %v60 = vsub.f32 %v38, %v58
    %61 = vst [vmem:[#allocation5] sm:$0xff] %v59
    %62 = vst [vmem:[#allocation5 + $0x8] sm:$0xff] %v60
    // Predicated region
    $region10: #{tpu_custom_call.1} parent=1 // pred_check
      _
    $region11: #{tpu_custom_call.1} parent=1 // pred_check_branch
      %64 = sbr.rel (0) target = $region13
    $region12: #{tpu_custom_call.1} parent=1 // pred_region
      %s66 = ssub.s32 256, 256
      %67 = vsyncadd [#allocation4], %s66
      %s68 = sshll.u32 [#allocation5], 4
      %s69 = int_to_ptr.vmem [resolvable:$true] %s68
      %74 = dma.vmem_to_hbm [thread:$0]  %s69, 256, %s1, [#allocation4], 128, 128, 8
    $region13: #{tpu_custom_call.1} parent=1 // pred_fallthru
      _
    // Predicated region
    $region14: #{tpu_custom_call.1} parent=1 // pred_check
      _
    $region15: #{tpu_custom_call.1} parent=1 // pred_check_branch
      %76 = sbr.rel (0) target = $region17
    $region16: #{tpu_custom_call.1} parent=1 // pred_region
      %77 = dma.done [#allocation4], 256
    $region17: #{tpu_custom_call.1} parent=1 // pred_fallthru
      _
    %78 = vsyncpa [#allocation3], 1
    %79 = vsyncpa [#allocation4], 1

</llo_original>
